<compile_context>
chip_gen: v7x
topology: tpu7x:2x2x1
jax: 0.10.0
libtpu: 0.0.40
codegen_flags: <defaults>
</compile_context>

<pallas_src>
import functools

import jax
import jax.numpy as jnp
from jax import lax
from jax.experimental import pallas as pl
from jax.experimental.pallas import tpu as pltpu


def _round_up(x, m):
    return (x + m - 1) // m * m


def _make_fused_mlp_kernel(num_linear):
    """Fused embedding-gather + MLP kernel.

    Kernel args: idx_ref (TB, 4) i32, emb_ref (vocab_p, embed_p) bf16,
                 w0, b0, ..., w{L-1}, b{L-1}, o_ref (TB, out_p) f32.
    w0 is (4*embed_p, h0_p) bf16 with per-slot row blocks; biases (1, out) f32.
    """

    def kernel(idx_ref, emb_ref, *refs):
        o_ref = refs[-1]
        p_refs = refs[:-1]
        tb, n_slots = idx_ref.shape
        vocab_p, embed_p = emb_ref.shape
        out0_p = p_refs[0].shape[1]

        ids = idx_ref[...]                                # (TB, 4) int32
        emb = emb_ref[...]                                # (vocab_p, embed_p) bf16
        lane_iota = lax.broadcasted_iota(jnp.int32, (tb, vocab_p), 1)

        # Layer 0: embedding gather (one-hot MXU matmul, exact for 0/1 weights)
        # fused with the first Linear, accumulated per embedding slot in f32.
        h = jnp.zeros((tb, out0_p), jnp.float32)
        for j in range(n_slots):
            col = ids[:, j:j + 1]                                       # (TB, 1)
            onehot = (col == lane_iota).astype(jnp.bfloat16)            # (TB, vocab_p)
            e_j = jnp.dot(onehot, emb,
                          preferred_element_type=jnp.float32)           # (TB, embed_p)
            w0_seg = p_refs[0][j * embed_p:(j + 1) * embed_p, :]        # (embed_p, out0_p)
            h = h + jnp.dot(e_j.astype(jnp.bfloat16), w0_seg,
                            preferred_element_type=jnp.float32)
        h = h + p_refs[1][...]                            # bias (1, out0_p) f32
        if num_linear > 1:
            h = jnp.maximum(h, 0.0)                       # ReLU (VPU, f32)

        # Remaining Linear (+ReLU) layers.
        for i in range(1, num_linear):
            w = p_refs[2 * i][...]                        # (in_p, out_p) bf16
            b = p_refs[2 * i + 1][...]                    # (1, out_p) f32
            h = jnp.dot(h.astype(jnp.bfloat16), w,
                        preferred_element_type=jnp.float32) + b
            if i < num_linear - 1:
                h = jnp.maximum(h, 0.0)

        o_ref[...] = h.astype(o_ref.dtype)

    return kernel


def _vmem_cap_bytes():
    # ~85% of this generation's physical VMEM (128 MiB v5e/v6e, 64 MiB v7x);
    # conservative fallback if the query is unavailable.
    try:
        return int(0.85 * pltpu.get_tpu_info().vmem_capacity_bytes)
    except Exception:
        return 64 << 20


@functools.partial(jax.jit, static_argnames=("num_linear", "tb"))
def mlp_fused_pallas(idx, emb_p, flat_params, num_linear, tb):
    """idx: [B_pad, 4] int32 (B_pad % tb == 0); emb_p: [vocab_p, embed_p] bf16.

    flat_params: (w0, b0, w1, b1, ...), padded/lane-aligned (weights bf16,
    biases f32 [1, out_p]).  Returns [B_pad, out_p] f32 (caller slices pad).
    """
    B_pad, n_slots = idx.shape
    vocab_p, embed_p = emb_p.shape
    out_p = flat_params[-2].shape[1]
    assert B_pad % tb == 0

    kernel = _make_fused_mlp_kernel(num_linear)

    # idx / output are tiled over the batch; the embedding table and all
    # weights/biases map to block (0, 0) every step -> VMEM-resident across
    # the whole grid (no per-step re-DMA).
    in_specs = [pl.BlockSpec((tb, n_slots), lambda i: (i, 0)),
                pl.BlockSpec(emb_p.shape, lambda i: (0, 0))]
    for p in flat_params:
        in_specs.append(pl.BlockSpec(p.shape, lambda i: (0, 0)))
    out_spec = pl.BlockSpec((tb, out_p), lambda i: (i, 0))

    # VMEM budget: resident params (double-buffered by default) + pipelined
    # idx/out tiles + widest f32 intermediates, with slack; capped at ~85% of
    # physical VMEM for this generation.
    param_bytes = int(emb_p.size) * emb_p.dtype.itemsize + sum(
        int(p.size) * p.dtype.itemsize for p in flat_params)
    max_feat = max(out_p, embed_p, vocab_p,
                   max(int(p.shape[-1]) for p in flat_params))
    act_bytes = 4 * tb * (128 + out_p + 4 * max_feat)
    vmem_limit = int(min(max(2 * (param_bytes + act_bytes) + (4 << 20), 32 << 20),
                         _vmem_cap_bytes()))

    # Advisory cost estimate so XLA can overlap neighbouring ops.
    flops = 2 * B_pad * (n_slots * vocab_p * embed_p) + sum(
        2 * B_pad * int(w.shape[0]) * int(w.shape[1]) for w in flat_params[0::2])
    bytes_accessed = int(idx.size) * 4 + param_bytes + B_pad * out_p * 4
    cost = pl.CostEstimate(flops=int(flops), transcendentals=0,
                           bytes_accessed=int(bytes_accessed))

    return pl.pallas_call(
        kernel,
        out_shape=jax.ShapeDtypeStruct((B_pad, out_p), jnp.float32),
        grid=(B_pad // tb,),
        in_specs=in_specs,
        out_specs=out_spec,
        compiler_params=pltpu.CompilerParams(
            dimension_semantics=("parallel",),   # shard batch tiles over TCs
            vmem_limit_bytes=vmem_limit,
        ),
        cost_estimate=cost,
    )(idx, emb_p, *flat_params)


class MLPModelPallas:
    """JAX/Pallas re-implementation of the PyTorch MLPModel forward pass."""

    LANE = 128      # lane-dim alignment
    SUBLANE = 8     # f32 sublane alignment

    def __init__(self, input_dim, hidden_dim, num_layers, output_dim,
                 embed_dim=64, dropout_rate=0.0, key=None):
        assert dropout_rate == 0.0, "inference path; dropout is identity"
        if key is None:
            key = jax.random.PRNGKey(0)
        self.embed_dim = embed_dim
        self.output_dim = output_dim
        self.vocab = input_dim
        self.vocab_p = _round_up(input_dim, self.LANE)
        self.embed_p = _round_up(embed_dim, self.LANE)

        D_in = 4 * embed_dim
        dims = [D_in] + [hidden_dim] * num_layers + [output_dim]
        dims_p = ([4 * self.embed_p]
                  + [_round_up(hidden_dim, self.LANE)] * num_layers
                  + [_round_up(output_dim, self.LANE)])
        self.out_p = dims_p[-1]

        keys = jax.random.split(key, 2 * (num_layers + 1) + 1)
        emb = jax.random.normal(keys[0], (input_dim, embed_dim), dtype=jnp.float32)
        self.embedding = emb                                    # f32 (reference)
        self.embedding_padded = jnp.pad(
            emb, ((0, self.vocab_p - input_dim),
                  (0, self.embed_p - embed_dim))).astype(jnp.bfloat16)

        logical, padded = [], []
        for i in range(len(dims) - 1):
            fan_in, fan_out = dims[i], dims[i + 1]
            bound = 1.0 / (fan_in ** 0.5)
            w = jax.random.uniform(keys[2 * i + 1], (fan_in, fan_out),
                                   minval=-bound, maxval=bound, dtype=jnp.float32)
            b = jax.random.uniform(keys[2 * i + 2], (1, fan_out),
                                   minval=-bound, maxval=bound, dtype=jnp.float32)
            logical.extend([w, b])
            if i == 0:
                # Scatter logical rows [j*embed_dim, (j+1)*embed_dim) into the
                # per-slot padded row blocks [j*embed_p, j*embed_p+embed_dim).
                w3 = w.reshape(4, embed_dim, fan_out)
                w3 = jnp.pad(w3, ((0, 0),
                                  (0, self.embed_p - embed_dim),
                                  (0, dims_p[1] - fan_out)))
                w_p = w3.reshape(4 * self.embed_p, dims_p[1]).astype(jnp.bfloat16)
            else:
                w_p = jnp.pad(w, ((0, dims_p[i] - fan_in),
                                  (0, dims_p[i + 1] - fan_out))).astype(jnp.bfloat16)
            b_p = jnp.pad(b, ((0, 0), (0, dims_p[i + 1] - fan_out)))   # f32
            padded.extend([w_p, b_p])

        self.params = tuple(logical)            # unpadded f32 (reference)
        self.padded_params = tuple(padded)      # padded bf16/f32 (kernel)
        self.num_linear = num_layers + 1

    def _batch_tile(self, B):
        # Tiles up to 1024 rows (mem-bound roofline plateaus ~512-1024); when
        # the batch allows two sublane-aligned tiles, force >= 2 grid steps so
        # the "parallel" batch axis can shard across both v7x TensorCores.
        tb = min(1024, _round_up(B, self.SUBLANE))
        if B >= 2 * self.SUBLANE and _round_up(B, tb) // tb < 2:
            tb = _round_up((B + 1) // 2, self.SUBLANE)
        return tb

    def __call__(self, x):
        # x: int [B, 4] (each row holds 4 embedding indices)
        B = x.shape[0]
        tb = self._batch_tile(B)
        B_pad = _round_up(B, tb)
        idx = x.astype(jnp.int32)
        if B_pad > B:
            idx = jnp.pad(idx, ((0, B_pad - B), (0, 0)))
        out = mlp_fused_pallas(idx, self.embedding_padded, self.padded_params,
                               self.num_linear, tb)
        return out[:B, :self.output_dim]

    def reference(self, x):
        """Pure-JAX reference using the same bf16-weight / f32-accum math."""
        emb = jnp.take(self.embedding, x, axis=0)
        h = emb.reshape(emb.shape[0], -1).astype(jnp.float32)
        for i in range(self.num_linear):
            w, b = self.params[2 * i], self.params[2 * i + 1]
            h = jnp.dot(h.astype(jnp.bfloat16), w.astype(jnp.bfloat16),
                        preferred_element_type=jnp.float32) + b
            if i < self.num_linear - 1:
                h = jnp.maximum(h, 0.0)
        return h


if __name__ == "__main__":
    # Small shapes consistent with the module's forward:
    #   x: [batch=8, 4] int indices into a vocab of size input_dim=32
    #   embed_dim=32 -> flattened feature dim 128, hidden=32 (lane-padded
    #   inside), 2 hidden layers, output_dim=8 (padded to 128, sliced).
    key = jax.random.PRNGKey(0)
    k_model, k_data = jax.random.split(key)

    model = MLPModelPallas(input_dim=32, hidden_dim=32, num_layers=2,
                           output_dim=8, embed_dim=32, key=k_model)

    x = jax.random.randint(k_data, (8, 4), minval=0, maxval=32, dtype=jnp.int32)

    out = jax.block_until_ready(model(x))
    ref = jax.block_until_ready(model.reference(x))

    assert out.shape == (8, 8)
    assert jnp.allclose(out, ref, atol=1e-2, rtol=1e-2), "mismatch vs reference"

    print("KERNEL_OK")
</pallas_src>

<mosaic_0001>
module attributes {stable_mosaic.version = 11 : i64} {
  func.func @kernel(%arg0: i32, %arg1: memref<8x4xi32, #tpu.memory_space<vmem>>, %arg2: memref<128x128xbf16, #tpu.memory_space<vmem>>, %arg3: memref<512x128xbf16, #tpu.memory_space<vmem>>, %arg4: memref<1x128xf32, #tpu.memory_space<vmem>>, %arg5: memref<128x128xbf16, #tpu.memory_space<vmem>>, %arg6: memref<1x128xf32, #tpu.memory_space<vmem>>, %arg7: memref<128x128xbf16, #tpu.memory_space<vmem>>, %arg8: memref<1x128xf32, #tpu.memory_space<vmem>>, %arg9: memref<8x128xf32, #tpu.memory_space<vmem>>) attributes {dimension_semantics = [#tpu.dimension_semantics<parallel>], iteration_bounds = array<i64: 1>, scalar_prefetch = 0 : i64, scratch_operands = 0 : i64, tpu.core_type = #tpu.core_type<tc>, window_params = [{transform_indices = @transform_0, window_bounds = array<i64: 8, 4>}, {pipeline_mode = #tpu.pipeline_mode<synchronous>, transform_indices = @transform_1, window_bounds = array<i64: 128, 128>}, {pipeline_mode = #tpu.pipeline_mode<synchronous>, transform_indices = @transform_2, window_bounds = array<i64: 512, 128>}, {pipeline_mode = #tpu.pipeline_mode<synchronous>, transform_indices = @transform_3, window_bounds = array<i64: 1, 128>}, {pipeline_mode = #tpu.pipeline_mode<synchronous>, transform_indices = @transform_4, window_bounds = array<i64: 128, 128>}, {pipeline_mode = #tpu.pipeline_mode<synchronous>, transform_indices = @transform_5, window_bounds = array<i64: 1, 128>}, {pipeline_mode = #tpu.pipeline_mode<synchronous>, transform_indices = @transform_6, window_bounds = array<i64: 128, 128>}, {pipeline_mode = #tpu.pipeline_mode<synchronous>, transform_indices = @transform_7, window_bounds = array<i64: 1, 128>}, {transform_indices = @transform_8, window_bounds = array<i64: 8, 128>}]} {
    %c0 = arith.constant 0 : index
    %c0_0 = arith.constant 0 : index
    %0 = vector.load %arg1[%c0, %c0_0] : memref<8x4xi32, #tpu.memory_space<vmem>>, vector<8x4xi32>
    %c0_1 = arith.constant 0 : index
    %c0_2 = arith.constant 0 : index
    %1 = vector.load %arg2[%c0_1, %c0_2] : memref<128x128xbf16, #tpu.memory_space<vmem>>, vector<128x128xbf16>
    %2 = tpu.iota {dimensions = array<i32: 1>} : vector<8x128xi32>
    %cst = arith.constant 0.000000e+00 : f32
    %3 = vector.broadcast %cst : f32 to vector<8x128xf32>
    %4 = vector.extract_strided_slice %0 {offsets = [0, 0], sizes = [8, 1], strides = [1, 1]} : vector<8x4xi32> to vector<8x1xi32>
    %5 = vector.broadcast %4 : vector<8x1xi32> to vector<8x128xi32>
    %6 = arith.cmpi eq, %5, %2 : vector<8x128xi32>
    %7 = arith.extui %6 : vector<8x128xi1> to vector<8x128xi32>
    %8 = arith.sitofp %7 : vector<8x128xi32> to vector<8x128xf32>
    %9 = arith.truncf %8 : vector<8x128xf32> to vector<8x128xbf16>
    %cst_3 = arith.constant dense<0.000000e+00> : vector<8x128xf32>
    %10 = tpu.matmul %9, %1, %cst_3 {dimension_numbers = #tpu.dot_dimension_numbers<[1], [0], [0], [1], [0, 0, 1, 1], [], []>} : vector<8x128xbf16>, vector<128x128xbf16>, vector<8x128xf32> -> vector<8x128xf32>
    %c0_4 = arith.constant 0 : index
    %c0_5 = arith.constant 0 : index
    %11 = vector.load %arg3[%c0_4, %c0_5] : memref<512x128xbf16, #tpu.memory_space<vmem>>, vector<128x128xbf16>
    %12 = arith.truncf %10 : vector<8x128xf32> to vector<8x128xbf16>
    %cst_6 = arith.constant dense<0.000000e+00> : vector<8x128xf32>
    %13 = tpu.matmul %12, %11, %cst_6 {dimension_numbers = #tpu.dot_dimension_numbers<[1], [0], [0], [1], [0, 0, 1, 1], [], []>} : vector<8x128xbf16>, vector<128x128xbf16>, vector<8x128xf32> -> vector<8x128xf32>
    %14 = arith.addf %3, %13 : vector<8x128xf32>
    %15 = vector.extract_strided_slice %0 {offsets = [0, 1], sizes = [8, 1], strides = [1, 1]} : vector<8x4xi32> to vector<8x1xi32>
    %16 = vector.broadcast %15 : vector<8x1xi32> to vector<8x128xi32>
    %17 = arith.cmpi eq, %16, %2 : vector<8x128xi32>
    %18 = arith.extui %17 : vector<8x128xi1> to vector<8x128xi32>
    %19 = arith.sitofp %18 : vector<8x128xi32> to vector<8x128xf32>
    %20 = arith.truncf %19 : vector<8x128xf32> to vector<8x128xbf16>
    %cst_7 = arith.constant dense<0.000000e+00> : vector<8x128xf32>
    %21 = tpu.matmul %20, %1, %cst_7 {dimension_numbers = #tpu.dot_dimension_numbers<[1], [0], [0], [1], [0, 0, 1, 1], [], []>} : vector<8x128xbf16>, vector<128x128xbf16>, vector<8x128xf32> -> vector<8x128xf32>
    %c128 = arith.constant 128 : index
    %c0_8 = arith.constant 0 : index
    %22 = vector.load %arg3[%c128, %c0_8] : memref<512x128xbf16, #tpu.memory_space<vmem>>, vector<128x128xbf16>
    %23 = arith.truncf %21 : vector<8x128xf32> to vector<8x128xbf16>
    %cst_9 = arith.constant dense<0.000000e+00> : vector<8x128xf32>
    %24 = tpu.matmul %23, %22, %cst_9 {dimension_numbers = #tpu.dot_dimension_numbers<[1], [0], [0], [1], [0, 0, 1, 1], [], []>} : vector<8x128xbf16>, vector<128x128xbf16>, vector<8x128xf32> -> vector<8x128xf32>
    %25 = arith.addf %14, %24 : vector<8x128xf32>
    %26 = vector.extract_strided_slice %0 {offsets = [0, 2], sizes = [8, 1], strides = [1, 1]} : vector<8x4xi32> to vector<8x1xi32>
    %27 = vector.broadcast %26 : vector<8x1xi32> to vector<8x128xi32>
    %28 = arith.cmpi eq, %27, %2 : vector<8x128xi32>
    %29 = arith.extui %28 : vector<8x128xi1> to vector<8x128xi32>
    %30 = arith.sitofp %29 : vector<8x128xi32> to vector<8x128xf32>
    %31 = arith.truncf %30 : vector<8x128xf32> to vector<8x128xbf16>
    %cst_10 = arith.constant dense<0.000000e+00> : vector<8x128xf32>
    %32 = tpu.matmul %31, %1, %cst_10 {dimension_numbers = #tpu.dot_dimension_numbers<[1], [0], [0], [1], [0, 0, 1, 1], [], []>} : vector<8x128xbf16>, vector<128x128xbf16>, vector<8x128xf32> -> vector<8x128xf32>
    %c256 = arith.constant 256 : index
    %c0_11 = arith.constant 0 : index
    %33 = vector.load %arg3[%c256, %c0_11] : memref<512x128xbf16, #tpu.memory_space<vmem>>, vector<128x128xbf16>
    %34 = arith.truncf %32 : vector<8x128xf32> to vector<8x128xbf16>
    %cst_12 = arith.constant dense<0.000000e+00> : vector<8x128xf32>
    %35 = tpu.matmul %34, %33, %cst_12 {dimension_numbers = #tpu.dot_dimension_numbers<[1], [0], [0], [1], [0, 0, 1, 1], [], []>} : vector<8x128xbf16>, vector<128x128xbf16>, vector<8x128xf32> -> vector<8x128xf32>
    %36 = arith.addf %25, %35 : vector<8x128xf32>
    %37 = vector.extract_strided_slice %0 {offsets = [0, 3], sizes = [8, 1], strides = [1, 1]} : vector<8x4xi32> to vector<8x1xi32>
    %38 = vector.broadcast %37 : vector<8x1xi32> to vector<8x128xi32>
    %39 = arith.cmpi eq, %38, %2 : vector<8x128xi32>
    %40 = arith.extui %39 : vector<8x128xi1> to vector<8x128xi32>
    %41 = arith.sitofp %40 : vector<8x128xi32> to vector<8x128xf32>
    %42 = arith.truncf %41 : vector<8x128xf32> to vector<8x128xbf16>
    %cst_13 = arith.constant dense<0.000000e+00> : vector<8x128xf32>
    %43 = tpu.matmul %42, %1, %cst_13 {dimension_numbers = #tpu.dot_dimension_numbers<[1], [0], [0], [1], [0, 0, 1, 1], [], []>} : vector<8x128xbf16>, vector<128x128xbf16>, vector<8x128xf32> -> vector<8x128xf32>
    %c384 = arith.constant 384 : index
    %c0_14 = arith.constant 0 : index
    %44 = vector.load %arg3[%c384, %c0_14] : memref<512x128xbf16, #tpu.memory_space<vmem>>, vector<128x128xbf16>
    %45 = arith.truncf %43 : vector<8x128xf32> to vector<8x128xbf16>
    %cst_15 = arith.constant dense<0.000000e+00> : vector<8x128xf32>
    %46 = tpu.matmul %45, %44, %cst_15 {dimension_numbers = #tpu.dot_dimension_numbers<[1], [0], [0], [1], [0, 0, 1, 1], [], []>} : vector<8x128xbf16>, vector<128x128xbf16>, vector<8x128xf32> -> vector<8x128xf32>
    %47 = arith.addf %36, %46 : vector<8x128xf32>
    %c0_16 = arith.constant 0 : index
    %c0_17 = arith.constant 0 : index
    %48 = vector.load %arg4[%c0_16, %c0_17] : memref<1x128xf32, #tpu.memory_space<vmem>>, vector<1x128xf32>
    %49 = vector.broadcast %48 : vector<1x128xf32> to vector<8x128xf32>
    %50 = arith.addf %47, %49 : vector<8x128xf32>
    %cst_18 = arith.constant 0.000000e+00 : f32
    %51 = vector.broadcast %cst_18 : f32 to vector<8x128xf32>
    %52 = arith.maximumf %50, %51 : vector<8x128xf32>
    %c0_19 = arith.constant 0 : index
    %c0_20 = arith.constant 0 : index
    %53 = vector.load %arg5[%c0_19, %c0_20] : memref<128x128xbf16, #tpu.memory_space<vmem>>, vector<128x128xbf16>
    %c0_21 = arith.constant 0 : index
    %c0_22 = arith.constant 0 : index
    %54 = vector.load %arg6[%c0_21, %c0_22] : memref<1x128xf32, #tpu.memory_space<vmem>>, vector<1x128xf32>
    %55 = arith.truncf %52 : vector<8x128xf32> to vector<8x128xbf16>
    %cst_23 = arith.constant dense<0.000000e+00> : vector<8x128xf32>
    %56 = tpu.matmul %55, %53, %cst_23 {dimension_numbers = #tpu.dot_dimension_numbers<[1], [0], [0], [1], [0, 0, 1, 1], [], []>} : vector<8x128xbf16>, vector<128x128xbf16>, vector<8x128xf32> -> vector<8x128xf32>
    %57 = vector.broadcast %54 : vector<1x128xf32> to vector<8x128xf32>
    %58 = arith.addf %56, %57 : vector<8x128xf32>
    %cst_24 = arith.constant 0.000000e+00 : f32
    %59 = vector.broadcast %cst_24 : f32 to vector<8x128xf32>
    %60 = arith.maximumf %58, %59 : vector<8x128xf32>
    %c0_25 = arith.constant 0 : index
    %c0_26 = arith.constant 0 : index
    %61 = vector.load %arg7[%c0_25, %c0_26] : memref<128x128xbf16, #tpu.memory_space<vmem>>, vector<128x128xbf16>
    %c0_27 = arith.constant 0 : index
    %c0_28 = arith.constant 0 : index
    %62 = vector.load %arg8[%c0_27, %c0_28] : memref<1x128xf32, #tpu.memory_space<vmem>>, vector<1x128xf32>
    %63 = arith.truncf %60 : vector<8x128xf32> to vector<8x128xbf16>
    %cst_29 = arith.constant dense<0.000000e+00> : vector<8x128xf32>
    %64 = tpu.matmul %63, %61, %cst_29 {dimension_numbers = #tpu.dot_dimension_numbers<[1], [0], [0], [1], [0, 0, 1, 1], [], []>} : vector<8x128xbf16>, vector<128x128xbf16>, vector<8x128xf32> -> vector<8x128xf32>
    %65 = vector.broadcast %62 : vector<1x128xf32> to vector<8x128xf32>
    %66 = arith.addf %64, %65 : vector<8x128xf32>
    %c0_30 = arith.constant 0 : index
    %c0_31 = arith.constant 0 : index
    %67 = vector.load %arg9[%c0_30, %c0_31] : memref<8x128xf32, #tpu.memory_space<vmem>>, vector<8x128xf32>
    tpu.vector_store %arg9[%c0_30, %c0_31], %66 {strides = array<i32>} : memref<8x128xf32, #tpu.memory_space<vmem>>, vector<8x128xf32>,
    return
  }
  func.func @transform_0(%arg0: i32) -> (i32, i32) {
    %c0_i32 = arith.constant 0 : i32
    %c0_i32_0 = arith.constant 0 : i32
    return %arg0, %c0_i32 : i32, i32
  }
  func.func @transform_1(%arg0: i32) -> (i32, i32) {
    %c0_i32 = arith.constant 0 : i32
    %c0_i32_0 = arith.constant 0 : i32
    %c0_i32_1 = arith.constant 0 : i32
    return %c0_i32, %c0_i32_0 : i32, i32
  }
  func.func @transform_2(%arg0: i32) -> (i32, i32) {
    %c0_i32 = arith.constant 0 : i32
    %c0_i32_0 = arith.constant 0 : i32
    %c0_i32_1 = arith.constant 0 : i32
    return %c0_i32, %c0_i32_0 : i32, i32
  }
  func.func @transform_3(%arg0: i32) -> (i32, i32) {
    %c0_i32 = arith.constant 0 : i32
    %c0_i32_0 = arith.constant 0 : i32
    %c0_i32_1 = arith.constant 0 : i32
    return %c0_i32, %c0_i32_0 : i32, i32
  }
  func.func @transform_4(%arg0: i32) -> (i32, i32) {
    %c0_i32 = arith.constant 0 : i32
    %c0_i32_0 = arith.constant 0 : i32
    %c0_i32_1 = arith.constant 0 : i32
    return %c0_i32, %c0_i32_0 : i32, i32
  }
  func.func @transform_5(%arg0: i32) -> (i32, i32) {
    %c0_i32 = arith.constant 0 : i32
    %c0_i32_0 = arith.constant 0 : i32
    %c0_i32_1 = arith.constant 0 : i32
    return %c0_i32, %c0_i32_0 : i32, i32
  }
  func.func @transform_6(%arg0: i32) -> (i32, i32) {
    %c0_i32 = arith.constant 0 : i32
    %c0_i32_0 = arith.constant 0 : i32
    %c0_i32_1 = arith.constant 0 : i32
    return %c0_i32, %c0_i32_0 : i32, i32
  }
  func.func @transform_7(%arg0: i32) -> (i32, i32) {
    %c0_i32 = arith.constant 0 : i32
    %c0_i32_0 = arith.constant 0 : i32
    %c0_i32_1 = arith.constant 0 : i32
    return %c0_i32, %c0_i32_0 : i32, i32
  }
  func.func @transform_8(%arg0: i32) -> (i32, i32) {
    %c0_i32 = arith.constant 0 : i32
    %c0_i32_0 = arith.constant 0 : i32
    return %arg0, %c0_i32 : i32, i32
  }
}

</mosaic_0001>

<llo_original>
// kernel: mlp_fused_pallas.1
$region0: #{mlp_fused_pallas.1}
  #allocation0 [shape = 'u32[]', space=smem, size = 0x4, offset = 0x4, fixed_abs, tag = 'smem constant byte address 0x4 - core index']
  #allocation1 [shape = 'u32[144,128]{1,0:T(1,128)}', space=vmem, size = 0x12000, scoped, tag = 'internal scratch']
  %s0 = inlined_call_operand.vmem [shape: s32[8,4], index: 0, kind: input, shape index: {}]
  %s1 = inlined_call_operand.hbm [shape: bf16[128,128], index: 1, kind: input, shape index: {}]
  %s2 = inlined_call_operand.hbm [shape: bf16[512,128], index: 2, kind: input, shape index: {}]
  %s3 = inlined_call_operand.vmem [shape: f32[1,128], index: 3, kind: input, shape index: {}]
  %s4 = inlined_call_operand.hbm [shape: bf16[128,128], index: 4, kind: input, shape index: {}]
  %s5 = inlined_call_operand.vmem [shape: f32[1,128], index: 5, kind: input, shape index: {}]
  %s6 = inlined_call_operand.hbm [shape: bf16[128,128], index: 6, kind: input, shape index: {}]
  %s7 = inlined_call_operand.vmem [shape: f32[1,128], index: 7, kind: input, shape index: {}]
  %s8 = inlined_call_operand.hbm [shape: f32[8,128], index: 8, kind: output, shape index: {}]
  %s9 = sld [smem:[#allocation0]]
  $region58: #{mlp_fused_pallas.1} parent=0
    _
  %s11 = ssub.s32 1, %s9
  %s12 = scalar_select 0, %s11, %s9
  $region1: #{mlp_fused_pallas.1} parent=0
    #allocation2 [shape = 'u8[32768]{0}', space=vmem, size = 0x8000, scoped, tag = 'input window, operand 1, single buffered']
    #allocation3 [shape = 's32[1]{0}', space=sflag, size = 0x4, scoped, tag = 'scoped memory for mlp_fused_pallas.1']
    #allocation4 [shape = 's32[1]{0}', space=sflag, size = 0x4, scoped, tag = 'scoped memory for mlp_fused_pallas.1']
    #allocation5 [shape = 'u8[131072]{0}', space=vmem, size = 0x20000, scoped, tag = 'input window, operand 2, single buffered']
    #allocation6 [shape = 's32[1]{0}', space=sflag, size = 0x4, scoped, tag = 'scoped memory for mlp_fused_pallas.1']
    #allocation7 [shape = 'u8[32768]{0}', space=vmem, size = 0x8000, scoped, tag = 'input window, operand 4, single buffered']
    #allocation8 [shape = 'u8[32768]{0}', space=vmem, size = 0x8000, scoped, tag = 'input window, operand 6, single buffered']
    #allocation9 [shape = 's32[1]{0}', space=sflag, size = 0x4, scoped, tag = 'scoped memory for mlp_fused_pallas.1']
    #allocation10 [shape = 'u8[4096]{0}', space=vmem, size = 0x1000, scoped, tag = 'output window, operand 0, single buffered']
    %13 = vsyncpa [#allocation3], 0
    %14 = vsyncpa [#allocation6], 0
    %15 = vsyncpa [#allocation9], 0
    %16 = vsyncpa [#allocation4], 0
    // Predicated region
    $region2: #{mlp_fused_pallas.1} parent=1 // pred_check
      _
    $region3: #{mlp_fused_pallas.1} parent=1 // pred_check_branch
      %18 = sbr.rel (0) target = $region5
    $region4: #{mlp_fused_pallas.1} parent=1 // pred_region
      _
    $region5: #{mlp_fused_pallas.1} parent=1 // pred_fallthru
      _
    // Predicated region
    $region6: #{mlp_fused_pallas.1} parent=1 // pred_check
      _
    $region7: #{mlp_fused_pallas.1} parent=1 // pred_check_branch
      %20 = sbr.rel (0) target = $region9
    $region8: #{mlp_fused_pallas.1} parent=1 // pred_region
      %s22 = ssub.s32 1024, 1024
      %23 = vsyncadd [#allocation3], %s22
      %s24 = sshll.u32 [#allocation2], 4
      %s25 = int_to_ptr.vmem [resolvable:$true] %s24
      %30 = dma.hbm_to_vmem [thread:$0]  %s1, 1024, %s25, [#allocation3], 64, 64, 4
    $region9: #{mlp_fused_pallas.1} parent=1 // pred_fallthru
      _
    // Predicated region
    $region10: #{mlp_fused_pallas.1} parent=1 // pred_check
      _
    $region11: #{mlp_fused_pallas.1} parent=1 // pred_check_branch
      %32 = sbr.rel (0) target = $region13
    $region12: #{mlp_fused_pallas.1} parent=1 // pred_region
      %s34 = ssub.s32 4096, 4096
      %35 = vsyncadd [#allocation6], %s34
      %s36 = sshll.u32 [#allocation5], 4
      %s37 = int_to_ptr.vmem [resolvable:$true] %s36
      %42 = dma.hbm_to_vmem [thread:$0]  %s2, 4096, %s37, [#allocation6], 64, 64, 4
    $region13: #{mlp_fused_pallas.1} parent=1 // pred_fallthru
      _
    // Predicated region
    $region14: #{mlp_fused_pallas.1} parent=1 // pred_check
      _
    $region15: #{mlp_fused_pallas.1} parent=1 // pred_check_branch
      %44 = sbr.rel (0) target = $region17
    $region16: #{mlp_fused_pallas.1} parent=1 // pred_region
      _
    $region17: #{mlp_fused_pallas.1} parent=1 // pred_fallthru
      _
    // Predicated region
    $region18: #{mlp_fused_pallas.1} parent=1 // pred_check
      _
    $region19: #{mlp_fused_pallas.1} parent=1 // pred_check_branch
      %46 = sbr.rel (0) target = $region21
    $region20: #{mlp_fused_pallas.1} parent=1 // pred_region
      %s48 = ssub.s32 1024, 1024
      %49 = vsyncadd [#allocation6], %s48
      %s50 = sshll.u32 [#allocation7], 4
      %s51 = int_to_ptr.vmem [resolvable:$true] %s50
      %56 = dma.hbm_to_vmem [thread:$0]  %s4, 1024, %s51, [#allocation6], 64, 64, 4
    $region21: #{mlp_fused_pallas.1} parent=1 // pred_fallthru
      _
    // Predicated region
    $region22: #{mlp_fused_pallas.1} parent=1 // pred_check
      _
    $region23: #{mlp_fused_pallas.1} parent=1 // pred_check_branch
      %58 = sbr.rel (0) target = $region25
    $region24: #{mlp_fused_pallas.1} parent=1 // pred_region
      _
    $region25: #{mlp_fused_pallas.1} parent=1 // pred_fallthru
      _
    // Predicated region
    $region26: #{mlp_fused_pallas.1} parent=1 // pred_check
      _
    $region27: #{mlp_fused_pallas.1} parent=1 // pred_check_branch
      %60 = sbr.rel (0) target = $region29
    $region28: #{mlp_fused_pallas.1} parent=1 // pred_region
      %s62 = ssub.s32 1024, 1024
      %63 = vsyncadd [#allocation9], %s62
      %s64 = sshll.u32 [#allocation8], 4
      %s65 = int_to_ptr.vmem [resolvable:$true] %s64
      %70 = dma.hbm_to_vmem [thread:$0]  %s6, 1024, %s65, [#allocation9], 64, 64, 4
    $region29: #{mlp_fused_pallas.1} parent=1 // pred_fallthru
      _
    // Predicated region
    $region30: #{mlp_fused_pallas.1} parent=1 // pred_check
      _
    $region31: #{mlp_fused_pallas.1} parent=1 // pred_check_branch
      %72 = sbr.rel (0) target = $region33
    $region32: #{mlp_fused_pallas.1} parent=1 // pred_region
      _
    $region33: #{mlp_fused_pallas.1} parent=1 // pred_fallthru
      _
    // Predicated region
    $region34: #{mlp_fused_pallas.1} parent=1 // pred_check
      _
    $region35: #{mlp_fused_pallas.1} parent=1 // pred_check_branch
      %74 = sbr.rel (0) target = $region37
    $region36: #{mlp_fused_pallas.1} parent=1 // pred_region
      %75 = dma.done [#allocation3], 1024
    $region37: #{mlp_fused_pallas.1} parent=1 // pred_fallthru
      _
    // Predicated region
    $region38: #{mlp_fused_pallas.1} parent=1 // pred_check
      _
    $region39: #{mlp_fused_pallas.1} parent=1 // pred_check_branch
      %77 = sbr.rel (0) target = $region41
    $region40: #{mlp_fused_pallas.1} parent=1 // pred_region
      %78 = dma.done [#allocation6], 4096
    $region41: #{mlp_fused_pallas.1} parent=1 // pred_fallthru
      _
    // Predicated region
    $region42: #{mlp_fused_pallas.1} parent=1 // pred_check
      _
    $region43: #{mlp_fused_pallas.1} parent=1 // pred_check_branch
      %80 = sbr.rel (0) target = $region45
    $region44: #{mlp_fused_pallas.1} parent=1 // pred_region
      %81 = dma.done [#allocation6], 1024
    $region45: #{mlp_fused_pallas.1} parent=1 // pred_fallthru
      _
    // Predicated region
    $region46: #{mlp_fused_pallas.1} parent=1 // pred_check
      _
    $region47: #{mlp_fused_pallas.1} parent=1 // pred_check_branch
      %83 = sbr.rel (0) target = $region49
    $region48: #{mlp_fused_pallas.1} parent=1 // pred_region
      %84 = dma.done [#allocation9], 1024
    $region49: #{mlp_fused_pallas.1} parent=1 // pred_fallthru
      _
    %v86 = vld [vmem:[%s0] sm:$0xff]
    %v87 = vld [vmem:[#allocation2] sm:$0xf]
    %v88 = vld [vmem:[#allocation2 + $0x4] sm:$0xf]
    %v89 = vld [vmem:[#allocation2 + $0x8] sm:$0xf]
    %v90 = vld [vmem:[#allocation2 + $0xc] sm:$0xf]
    %v91 = vld [vmem:[#allocation2 + $0x10] sm:$0xf]
    %v92 = vld [vmem:[#allocation2 + $0x14] sm:$0xf]
    %v93 = vld [vmem:[#allocation2 + $0x18] sm:$0xf]
    %v94 = vld [vmem:[#allocation2 + $0x1c] sm:$0xf]
    %v95 = vld [vmem:[#allocation2 + $0x20] sm:$0xf]
    %v96 = vld [vmem:[#allocation2 + $0x24] sm:$0xf]
    %v97 = vld [vmem:[#allocation2 + $0x28] sm:$0xf]
    %v98 = vld [vmem:[#allocation2 + $0x2c] sm:$0xf]
    %v99 = vld [vmem:[#allocation2 + $0x30] sm:$0xf]
    %v100 = vld [vmem:[#allocation2 + $0x34] sm:$0xf]
    %v101 = vld [vmem:[#allocation2 + $0x38] sm:$0xf]
    %v102 = vld [vmem:[#allocation2 + $0x3c] sm:$0xf]
    %v103 = vlaneseq
    %v104 = vand.u32 %v103, 127
    %105 = vset.pattern.permute.xlu0 0
    %106 = vperm.xlu0 %105, %v86
    %v107 = vpop.permute.xlu0 %106
    %vm108 = vcmp.eq.s32.totalorder %v107, %v104
    %v109 = vsel %vm108, 1, 0
    %v110 = vcvt.s32.f32 %v109
    %v111 = vpack.c.bf16 %v110, %v110
    %v128 = vunpack.c.l.b16 %v87
    %v129 = vunpack.c.l.b16 %v88
    %v130 = vunpack.c.l.b16 %v89
    %v131 = vunpack.c.l.b16 %v90
    %v132 = vunpack.c.l.b16 %v91
    %v133 = vunpack.c.l.b16 %v92
    %v134 = vunpack.c.l.b16 %v93
    %v135 = vunpack.c.l.b16 %v94
    %v136 = vunpack.c.l.b16 %v95
    %v137 = vunpack.c.l.b16 %v96
    %v138 = vunpack.c.l.b16 %v97
    %v139 = vunpack.c.l.b16 %v98
    %v140 = vunpack.c.l.b16 %v99
    %v141 = vunpack.c.l.b16 %v100
    %v142 = vunpack.c.l.b16 %v101
    %v143 = vunpack.c.l.b16 %v102
    %v144 = vpack.c.b16 %v129, %v128
    %v145 = vpack.c.b16 %v131, %v130
    %v146 = vpack.c.b16 %v133, %v132
    %v147 = vpack.c.b16 %v135, %v134
    %v148 = vpack.c.b16 %v137, %v136
    %v149 = vpack.c.b16 %v139, %v138
    %v150 = vpack.c.b16 %v141, %v140
    %v151 = vpack.c.b16 %v143, %v142
    %160 = vmatprep.subr.bf16.mxu0 0
    %161 = vmatpush1.bf16.msra.mxu0 %v144
    %162 = vmatprep.subr.bf16.mxu0 0
    %163 = vmatpush1.bf16.msra.mxu0 %v145
    %164 = vmatprep.subr.bf16.mxu0 0
    %165 = vmatpush1.bf16.msra.mxu0 %v146
    %166 = vmatprep.subr.bf16.mxu0 0
    %167 = vmatpush1.bf16.msra.mxu0 %v147
    %168 = vmatprep.subr.bf16.mxu0 0
    %169 = vmatpush1.bf16.msra.mxu0 %v148
    %170 = vmatprep.subr.bf16.mxu0 0
    %171 = vmatpush1.bf16.msra.mxu0 %v149
    %172 = vmatprep.subr.bf16.mxu0 0
    %173 = vmatpush1.bf16.msra.mxu0 %v150
    %174 = vmatprep.subr.bf16.mxu0 0
    %175 = vmatpush1.bf16.msra.mxu0 %v151
    %176 = vmatprep.subr.bf16.mxu0 0
    %177 = vmatpush1.bf16.msra.mxu0 0
    %178 = vmatprep.subr.bf16.mxu0 0
    %179 = vmatpush1.bf16.msra.mxu0 0
    %180 = vmatprep.subr.bf16.mxu0 0
    %181 = vmatpush1.bf16.msra.mxu0 0
    %182 = vmatprep.subr.bf16.mxu0 0
    %183 = vmatpush1.bf16.msra.mxu0 0
    %184 = vmatprep.subr.bf16.mxu0 0
    %185 = vmatpush1.bf16.msra.mxu0 0
    %186 = vmatprep.subr.bf16.mxu0 0
    %187 = vmatpush1.bf16.msra.mxu0 0
    %188 = vmatprep.subr.bf16.mxu0 0
    %189 = vmatpush1.bf16.msra.mxu0 0
    %190 = vmatprep.subr.bf16.mxu0 0
    %191 = vmatpush1.bf16.msra.mxu0 0
    %192 = vmatprep.mubr.bf16.mxu0 0
    %193 = vmatmul.mubr.bf16.gmra.mrb[0].mxu0 %v111
    %v194 = vpop.f32.mrb[0].mxu0
    %v195 = vadd.f32 0.0, %v194
    %v196 = vpop.f32.mrb[0].mxu0
    %v197 = vpop.f32.mrb[0].mxu0
    %v198 = vpop.f32.mrb[0].mxu0
    %199 = vdwg.mxu0
    %v200 = vld [vmem:[#allocation5] sm:$0xf]
    %v201 = vld [vmem:[#allocation5 + $0x4] sm:$0xf]
    %v202 = vld [vmem:[#allocation5 + $0x8] sm:$0xf]
    %v203 = vld [vmem:[#allocation5 + $0xc] sm:$0xf]
    %v204 = vld [vmem:[#allocation5 + $0x10] sm:$0xf]
    %v205 = vld [vmem:[#allocation5 + $0x14] sm:$0xf]
    %v206 = vld [vmem:[#allocation5 + $0x18] sm:$0xf]
    %v207 = vld [vmem:[#allocation5 + $0x1c] sm:$0xf]
    %v208 = vld [vmem:[#allocation5 + $0x20] sm:$0xf]
    %v209 = vld [vmem:[#allocation5 + $0x24] sm:$0xf]
    %v210 = vld [vmem:[#allocation5 + $0x28] sm:$0xf]
    %v211 = vld [vmem:[#allocation5 + $0x2c] sm:$0xf]
    %v212 = vld [vmem:[#allocation5 + $0x30] sm:$0xf]
    %v213 = vld [vmem:[#allocation5 + $0x34] sm:$0xf]
    %v214 = vld [vmem:[#allocation5 + $0x38] sm:$0xf]
    %v215 = vld [vmem:[#allocation5 + $0x3c] sm:$0xf]
    %v216 = vpack.c.bf16 %v195, %v195
    %217 = vset.pattern.permute.xlu0 1
    %218 = vperm.xlu0 %217, %v86
    %v219 = vpop.permute.xlu0 %218
    %vm220 = vcmp.eq.s32.totalorder %v219, %v104
    %v221 = vsel %vm220, 1, 0
    %v222 = vcvt.s32.f32 %v221
    %v223 = vpack.c.bf16 %v222, %v222
    %224 = vmatprep.subr.bf16.mxu0 0
    %225 = vmatpush1.bf16.msra.mxu0 %v144
    %226 = vmatprep.subr.bf16.mxu0 0
    %227 = vmatpush1.bf16.msra.mxu0 %v145
    %228 = vmatprep.subr.bf16.mxu0 0
    %229 = vmatpush1.bf16.msra.mxu0 %v146
    %230 = vmatprep.subr.bf16.mxu0 0
    %231 = vmatpush1.bf16.msra.mxu0 %v147
    %232 = vmatprep.subr.bf16.mxu0 0
    %233 = vmatpush1.bf16.msra.mxu0 %v148
    %234 = vmatprep.subr.bf16.mxu0 0
    %235 = vmatpush1.bf16.msra.mxu0 %v149
    %236 = vmatprep.subr.bf16.mxu0 0
    %237 = vmatpush1.bf16.msra.mxu0 %v150
    %238 = vmatprep.subr.bf16.mxu0 0
    %239 = vmatpush1.bf16.msra.mxu0 %v151
    %240 = vmatprep.subr.bf16.mxu0 0
    %241 = vmatpush1.bf16.msra.mxu0 0
    %242 = vmatprep.subr.bf16.mxu0 0
    %243 = vmatpush1.bf16.msra.mxu0 0
    %244 = vmatprep.subr.bf16.mxu0 0
    %245 = vmatpush1.bf16.msra.mxu0 0
    %246 = vmatprep.subr.bf16.mxu0 0
    %247 = vmatpush1.bf16.msra.mxu0 0
    %248 = vmatprep.subr.bf16.mxu0 0
    %249 = vmatpush1.bf16.msra.mxu0 0
    %250 = vmatprep.subr.bf16.mxu0 0
    %251 = vmatpush1.bf16.msra.mxu0 0
    %252 = vmatprep.subr.bf16.mxu0 0
    %253 = vmatpush1.bf16.msra.mxu0 0
    %254 = vmatprep.subr.bf16.mxu0 0
    %255 = vmatpush1.bf16.msra.mxu0 0
    %256 = vmatprep.mubr.bf16.mxu0 0
    %257 = vmatmul.mubr.bf16.gmra.mrb[0].mxu0 %v223
    %v258 = vpop.f32.mrb[0].mxu0
    %v259 = vadd.f32 0.0, %v258
    %v260 = vpop.f32.mrb[0].mxu0
    %v261 = vpop.f32.mrb[0].mxu0
    %v262 = vpop.f32.mrb[0].mxu0
    %263 = vdwg.mxu0
    %v264 = vld [vmem:[#allocation5 + $0x40] sm:$0xf]
    %v265 = vld [vmem:[#allocation5 + $0x44] sm:$0xf]
    %v266 = vld [vmem:[#allocation5 + $0x48] sm:$0xf]
    %v267 = vld [vmem:[#allocation5 + $0x4c] sm:$0xf]
    %v268 = vld [vmem:[#allocation5 + $0x50] sm:$0xf]
    %v269 = vld [vmem:[#allocation5 + $0x54] sm:$0xf]
    %v270 = vld [vmem:[#allocation5 + $0x58] sm:$0xf]
    %v271 = vld [vmem:[#allocation5 + $0x5c] sm:$0xf]
    %v272 = vld [vmem:[#allocation5 + $0x60] sm:$0xf]
    %v273 = vld [vmem:[#allocation5 + $0x64] sm:$0xf]
    %v274 = vld [vmem:[#allocation5 + $0x68] sm:$0xf]
    %v275 = vld [vmem:[#allocation5 + $0x6c] sm:$0xf]
    %v276 = vld [vmem:[#allocation5 + $0x70] sm:$0xf]
    %v277 = vld [vmem:[#allocation5 + $0x74] sm:$0xf]
    %v278 = vld [vmem:[#allocation5 + $0x78] sm:$0xf]
    %v279 = vld [vmem:[#allocation5 + $0x7c] sm:$0xf]
    %v280 = vpack.c.bf16 %v259, %v259
    %v297 = vunpack.c.l.b16 %v264
    %v298 = vunpack.c.l.b16 %v265
    %v299 = vunpack.c.l.b16 %v266
    %v300 = vunpack.c.l.b16 %v267
    %v301 = vunpack.c.l.b16 %v268
    %v302 = vunpack.c.l.b16 %v269
    %v303 = vunpack.c.l.b16 %v270
    %v304 = vunpack.c.l.b16 %v271
    %v305 = vunpack.c.l.b16 %v272
    %v306 = vunpack.c.l.b16 %v273
    %v307 = vunpack.c.l.b16 %v274
    %v308 = vunpack.c.l.b16 %v275
    %v309 = vunpack.c.l.b16 %v276
    %v310 = vunpack.c.l.b16 %v277
    %v311 = vunpack.c.l.b16 %v278
    %v312 = vunpack.c.l.b16 %v279
    %v313 = vpack.c.b16 %v298, %v297
    %v314 = vpack.c.b16 %v300, %v299
    %v315 = vpack.c.b16 %v302, %v301
    %v316 = vpack.c.b16 %v304, %v303
    %v317 = vpack.c.b16 %v306, %v305
    %v318 = vpack.c.b16 %v308, %v307
    %v319 = vpack.c.b16 %v310, %v309
    %v320 = vpack.c.b16 %v312, %v311
    %329 = vmatprep.subr.bf16.mxu0 0
    %330 = vmatpush1.bf16.msra.mxu0 %v313
    %331 = vmatprep.subr.bf16.mxu0 0
    %332 = vmatpush1.bf16.msra.mxu0 %v314
    %333 = vmatprep.subr.bf16.mxu0 0
    %334 = vmatpush1.bf16.msra.mxu0 %v315
    %335 = vmatprep.subr.bf16.mxu0 0
    %336 = vmatpush1.bf16.msra.mxu0 %v316
    %337 = vmatprep.subr.bf16.mxu0 0
    %338 = vmatpush1.bf16.msra.mxu0 %v317
    %339 = vmatprep.subr.bf16.mxu0 0
    %340 = vmatpush1.bf16.msra.mxu0 %v318
    %341 = vmatprep.subr.bf16.mxu0 0
    %342 = vmatpush1.bf16.msra.mxu0 %v319
    %343 = vmatprep.subr.bf16.mxu0 0
    %344 = vmatpush1.bf16.msra.mxu0 %v320
    %345 = vmatprep.subr.bf16.mxu0 0
    %346 = vmatpush1.bf16.msra.mxu0 0
    %347 = vmatprep.subr.bf16.mxu0 0
    %348 = vmatpush1.bf16.msra.mxu0 0
    %349 = vmatprep.subr.bf16.mxu0 0
    %350 = vmatpush1.bf16.msra.mxu0 0
    %351 = vmatprep.subr.bf16.mxu0 0
    %352 = vmatpush1.bf16.msra.mxu0 0
    %353 = vmatprep.subr.bf16.mxu0 0
    %354 = vmatpush1.bf16.msra.mxu0 0
    %355 = vmatprep.subr.bf16.mxu0 0
    %356 = vmatpush1.bf16.msra.mxu0 0
    %357 = vmatprep.subr.bf16.mxu0 0
    %358 = vmatpush1.bf16.msra.mxu0 0
    %359 = vmatprep.subr.bf16.mxu0 0
    %360 = vmatpush1.bf16.msra.mxu0 0
    %361 = vmatprep.mubr.bf16.mxu0 0
    %362 = vmatmul.mubr.bf16.gmra.mrb[0].mxu0 %v280
    %v363 = vpop.f32.mrb[0].mxu0
    %v364 = vadd.f32 0.0, %v363
    %v365 = vpop.f32.mrb[0].mxu0
    %v366 = vpop.f32.mrb[0].mxu0
    %v367 = vpop.f32.mrb[0].mxu0
    %368 = vdwg.mxu0
    %v385 = vunpack.c.l.b16 %v200
    %v386 = vunpack.c.l.b16 %v201
    %v387 = vunpack.c.l.b16 %v202
    %v388 = vunpack.c.l.b16 %v203
    %v389 = vunpack.c.l.b16 %v204
    %v390 = vunpack.c.l.b16 %v205
    %v391 = vunpack.c.l.b16 %v206
    %v392 = vunpack.c.l.b16 %v207
    %v393 = vunpack.c.l.b16 %v208
    %v394 = vunpack.c.l.b16 %v209
    %v395 = vunpack.c.l.b16 %v210
    %v396 = vunpack.c.l.b16 %v211
    %v397 = vunpack.c.l.b16 %v212
    %v398 = vunpack.c.l.b16 %v213
    %v399 = vunpack.c.l.b16 %v214
    %v400 = vunpack.c.l.b16 %v215
    %v401 = vpack.c.b16 %v386, %v385
    %v402 = vpack.c.b16 %v388, %v387
    %v403 = vpack.c.b16 %v390, %v389
    %v404 = vpack.c.b16 %v392, %v391
    %v405 = vpack.c.b16 %v394, %v393
    %v406 = vpack.c.b16 %v396, %v395
    %v407 = vpack.c.b16 %v398, %v397
    %v408 = vpack.c.b16 %v400, %v399
    %417 = vmatprep.subr.bf16.mxu0 0
    %418 = vmatpush1.bf16.msra.mxu0 %v401
    %419 = vmatprep.subr.bf16.mxu0 0
    %420 = vmatpush1.bf16.msra.mxu0 %v402
    %421 = vmatprep.subr.bf16.mxu0 0
    %422 = vmatpush1.bf16.msra.mxu0 %v403
    %423 = vmatprep.subr.bf16.mxu0 0
    %424 = vmatpush1.bf16.msra.mxu0 %v404
    %425 = vmatprep.subr.bf16.mxu0 0
    %426 = vmatpush1.bf16.msra.mxu0 %v405
    %427 = vmatprep.subr.bf16.mxu0 0
    %428 = vmatpush1.bf16.msra.mxu0 %v406
    %429 = vmatprep.subr.bf16.mxu0 0
    %430 = vmatpush1.bf16.msra.mxu0 %v407
    %431 = vmatprep.subr.bf16.mxu0 0
    %432 = vmatpush1.bf16.msra.mxu0 %v408
    %433 = vmatprep.subr.bf16.mxu0 0
    %434 = vmatpush1.bf16.msra.mxu0 0
    %435 = vmatprep.subr.bf16.mxu0 0
    %436 = vmatpush1.bf16.msra.mxu0 0
    %437 = vmatprep.subr.bf16.mxu0 0
    %438 = vmatpush1.bf16.msra.mxu0 0
    %439 = vmatprep.subr.bf16.mxu0 0
    %440 = vmatpush1.bf16.msra.mxu0 0
    %441 = vmatprep.subr.bf16.mxu0 0
    %442 = vmatpush1.bf16.msra.mxu0 0
    %443 = vmatprep.subr.bf16.mxu0 0
    %444 = vmatpush1.bf16.msra.mxu0 0
    %445 = vmatprep.subr.bf16.mxu0 0
    %446 = vmatpush1.bf16.msra.mxu0 0
    %447 = vmatprep.subr.bf16.mxu0 0
    %448 = vmatpush1.bf16.msra.mxu0 0
    %449 = vmatprep.mubr.bf16.mxu0 0
    %450 = vmatmul.mubr.bf16.gmra.mrb[0].mxu0 %v216
    %v451 = vpop.f32.mrb[0].mxu0
    %v452 = vadd.f32 %v364, %v451
    %v453 = vpop.f32.mrb[0].mxu0
    %v454 = vpop.f32.mrb[0].mxu0
    %v455 = vpop.f32.mrb[0].mxu0
    %456 = vdwg.mxu0
    %457 = vset.pattern.permute.xlu0 2
    %458 = vperm.xlu0 %457, %v86
    %v459 = vpop.permute.xlu0 %458
    %vm460 = vcmp.eq.s32.totalorder %v459, %v104
    %v461 = vsel %vm460, 1, 0
    %v462 = vcvt.s32.f32 %v461
    %v463 = vpack.c.bf16 %v462, %v462
    %464 = vmatprep.subr.bf16.mxu0 0
    %465 = vmatpush1.bf16.msra.mxu0 %v144
    %466 = vmatprep.subr.bf16.mxu0 0
    %467 = vmatpush1.bf16.msra.mxu0 %v145
    %468 = vmatprep.subr.bf16.mxu0 0
    %469 = vmatpush1.bf16.msra.mxu0 %v146
    %470 = vmatprep.subr.bf16.mxu0 0
    %471 = vmatpush1.bf16.msra.mxu0 %v147
    %472 = vmatprep.subr.bf16.mxu0 0
    %473 = vmatpush1.bf16.msra.mxu0 %v148
    %474 = vmatprep.subr.bf16.mxu0 0
    %475 = vmatpush1.bf16.msra.mxu0 %v149
    %476 = vmatprep.subr.bf16.mxu0 0
    %477 = vmatpush1.bf16.msra.mxu0 %v150
    %478 = vmatprep.subr.bf16.mxu0 0
    %479 = vmatpush1.bf16.msra.mxu0 %v151
    %480 = vmatprep.subr.bf16.mxu0 0
    %481 = vmatpush1.bf16.msra.mxu0 0
    %482 = vmatprep.subr.bf16.mxu0 0
    %483 = vmatpush1.bf16.msra.mxu0 0
    %484 = vmatprep.subr.bf16.mxu0 0
    %485 = vmatpush1.bf16.msra.mxu0 0
    %486 = vmatprep.subr.bf16.mxu0 0
    %487 = vmatpush1.bf16.msra.mxu0 0
    %488 = vmatprep.subr.bf16.mxu0 0
    %489 = vmatpush1.bf16.msra.mxu0 0
    %490 = vmatprep.subr.bf16.mxu0 0
    %491 = vmatpush1.bf16.msra.mxu0 0
    %492 = vmatprep.subr.bf16.mxu0 0
    %493 = vmatpush1.bf16.msra.mxu0 0
    %494 = vmatprep.subr.bf16.mxu0 0
    %495 = vmatpush1.bf16.msra.mxu0 0
    %496 = vmatprep.mubr.bf16.mxu0 0
    %497 = vmatmul.mubr.bf16.gmra.mrb[0].mxu0 %v463
    %v498 = vpop.f32.mrb[0].mxu0
    %v499 = vadd.f32 0.0, %v498
    %v500 = vpop.f32.mrb[0].mxu0
    %v501 = vpop.f32.mrb[0].mxu0
    %v502 = vpop.f32.mrb[0].mxu0
    %503 = vdwg.mxu0
    %v504 = vld [vmem:[#allocation5 + $0x80] sm:$0xf]
    %v505 = vld [vmem:[#allocation5 + $0x84] sm:$0xf]
    %v506 = vld [vmem:[#allocation5 + $0x88] sm:$0xf]
    %v507 = vld [vmem:[#allocation5 + $0x8c] sm:$0xf]
    %v508 = vld [vmem:[#allocation5 + $0x90] sm:$0xf]
    %v509 = vld [vmem:[#allocation5 + $0x94] sm:$0xf]
    %v510 = vld [vmem:[#allocation5 + $0x98] sm:$0xf]
    %v511 = vld [vmem:[#allocation5 + $0x9c] sm:$0xf]
    %v512 = vld [vmem:[#allocation5 + $0xa0] sm:$0xf]
    %v513 = vld [vmem:[#allocation5 + $0xa4] sm:$0xf]
    %v514 = vld [vmem:[#allocation5 + $0xa8] sm:$0xf]
    %v515 = vld [vmem:[#allocation5 + $0xac] sm:$0xf]
    %v516 = vld [vmem:[#allocation5 + $0xb0] sm:$0xf]
    %v517 = vld [vmem:[#allocation5 + $0xb4] sm:$0xf]
    %v518 = vld [vmem:[#allocation5 + $0xb8] sm:$0xf]
    %v519 = vld [vmem:[#allocation5 + $0xbc] sm:$0xf]
    %v520 = vpack.c.bf16 %v499, %v499
    %v537 = vunpack.c.l.b16 %v504
    %v538 = vunpack.c.l.b16 %v505
    %v539 = vunpack.c.l.b16 %v506
    %v540 = vunpack.c.l.b16 %v507
    %v541 = vunpack.c.l.b16 %v508
    %v542 = vunpack.c.l.b16 %v509
    %v543 = vunpack.c.l.b16 %v510
    %v544 = vunpack.c.l.b16 %v511
    %v545 = vunpack.c.l.b16 %v512
    %v546 = vunpack.c.l.b16 %v513
    %v547 = vunpack.c.l.b16 %v514
    %v548 = vunpack.c.l.b16 %v515
    %v549 = vunpack.c.l.b16 %v516
    %v550 = vunpack.c.l.b16 %v517
    %v551 = vunpack.c.l.b16 %v518
    %v552 = vunpack.c.l.b16 %v519
    %v553 = vpack.c.b16 %v538, %v537
    %v554 = vpack.c.b16 %v540, %v539
    %v555 = vpack.c.b16 %v542, %v541
    %v556 = vpack.c.b16 %v544, %v543
    %v557 = vpack.c.b16 %v546, %v545
    %v558 = vpack.c.b16 %v548, %v547
    %v559 = vpack.c.b16 %v550, %v549
    %v560 = vpack.c.b16 %v552, %v551
    %569 = vmatprep.subr.bf16.mxu0 0
    %570 = vmatpush1.bf16.msra.mxu0 %v553
    %571 = vmatprep.subr.bf16.mxu0 0
    %572 = vmatpush1.bf16.msra.mxu0 %v554
    %573 = vmatprep.subr.bf16.mxu0 0
    %574 = vmatpush1.bf16.msra.mxu0 %v555
    %575 = vmatprep.subr.bf16.mxu0 0
    %576 = vmatpush1.bf16.msra.mxu0 %v556
    %577 = vmatprep.subr.bf16.mxu0 0
    %578 = vmatpush1.bf16.msra.mxu0 %v557
    %579 = vmatprep.subr.bf16.mxu0 0
    %580 = vmatpush1.bf16.msra.mxu0 %v558
    %581 = vmatprep.subr.bf16.mxu0 0
    %582 = vmatpush1.bf16.msra.mxu0 %v559
    %583 = vmatprep.subr.bf16.mxu0 0
    %584 = vmatpush1.bf16.msra.mxu0 %v560
    %585 = vmatprep.subr.bf16.mxu0 0
    %586 = vmatpush1.bf16.msra.mxu0 0
    %587 = vmatprep.subr.bf16.mxu0 0
    %588 = vmatpush1.bf16.msra.mxu0 0
    %589 = vmatprep.subr.bf16.mxu0 0
    %590 = vmatpush1.bf16.msra.mxu0 0
    %591 = vmatprep.subr.bf16.mxu0 0
    %592 = vmatpush1.bf16.msra.mxu0 0
    %593 = vmatprep.subr.bf16.mxu0 0
    %594 = vmatpush1.bf16.msra.mxu0 0
    %595 = vmatprep.subr.bf16.mxu0 0
    %596 = vmatpush1.bf16.msra.mxu0 0
    %597 = vmatprep.subr.bf16.mxu0 0
    %598 = vmatpush1.bf16.msra.mxu0 0
    %599 = vmatprep.subr.bf16.mxu0 0
    %600 = vmatpush1.bf16.msra.mxu0 0
    %601 = vmatprep.mubr.bf16.mxu0 0
    %602 = vmatmul.mubr.bf16.gmra.mrb[0].mxu0 %v520
    %v603 = vpop.f32.mrb[0].mxu0
    %v604 = vadd.f32 0.0, %v603
    %v605 = vpop.f32.mrb[0].mxu0
    %v606 = vpop.f32.mrb[0].mxu0
    %v607 = vpop.f32.mrb[0].mxu0
    %608 = vdwg.mxu0
    %v609 = vadd.f32 %v452, %v604
    %610 = vset.pattern.permute.xlu0 3
    %611 = vperm.xlu0 %610, %v86
    %v612 = vpop.permute.xlu0 %611
    %vm613 = vcmp.eq.s32.totalorder %v612, %v104
    %v614 = vsel %vm613, 1, 0
    %v615 = vcvt.s32.f32 %v614
    %v616 = vpack.c.bf16 %v615, %v615
    %617 = vmatprep.subr.bf16.mxu0 0
    %618 = vmatpush1.bf16.msra.mxu0 %v144
    %619 = vmatprep.subr.bf16.mxu0 0
    %620 = vmatpush1.bf16.msra.mxu0 %v145
    %621 = vmatprep.subr.bf16.mxu0 0
    %622 = vmatpush1.bf16.msra.mxu0 %v146
    %623 = vmatprep.subr.bf16.mxu0 0
    %624 = vmatpush1.bf16.msra.mxu0 %v147
    %625 = vmatprep.subr.bf16.mxu0 0
    %626 = vmatpush1.bf16.msra.mxu0 %v148
    %627 = vmatprep.subr.bf16.mxu0 0
    %628 = vmatpush1.bf16.msra.mxu0 %v149
    %629 = vmatprep.subr.bf16.mxu0 0
    %630 = vmatpush1.bf16.msra.mxu0 %v150
    %631 = vmatprep.subr.bf16.mxu0 0
    %632 = vmatpush1.bf16.msra.mxu0 %v151
    %633 = vmatprep.subr.bf16.mxu0 0
    %634 = vmatpush1.bf16.msra.mxu0 0
    %635 = vmatprep.subr.bf16.mxu0 0
    %636 = vmatpush1.bf16.msra.mxu0 0
    %637 = vmatprep.subr.bf16.mxu0 0
    %638 = vmatpush1.bf16.msra.mxu0 0
    %639 = vmatprep.subr.bf16.mxu0 0
    %640 = vmatpush1.bf16.msra.mxu0 0
    %641 = vmatprep.subr.bf16.mxu0 0
    %642 = vmatpush1.bf16.msra.mxu0 0
    %643 = vmatprep.subr.bf16.mxu0 0
    %644 = vmatpush1.bf16.msra.mxu0 0
    %645 = vmatprep.subr.bf16.mxu0 0
    %646 = vmatpush1.bf16.msra.mxu0 0
    %647 = vmatprep.subr.bf16.mxu0 0
    %648 = vmatpush1.bf16.msra.mxu0 0
    %649 = vmatprep.mubr.bf16.mxu0 0
    %650 = vmatmul.mubr.bf16.gmra.mrb[0].mxu0 %v616
    %v651 = vpop.f32.mrb[0].mxu0
    %v652 = vadd.f32 0.0, %v651
    %v653 = vpop.f32.mrb[0].mxu0
    %v654 = vpop.f32.mrb[0].mxu0
    %v655 = vpop.f32.mrb[0].mxu0
    %656 = vdwg.mxu0
    %v657 = vld [vmem:[#allocation5 + $0xc0] sm:$0xf]
    %v658 = vld [vmem:[#allocation5 + $0xc4] sm:$0xf]
    %v659 = vld [vmem:[#allocation5 + $0xc8] sm:$0xf]
    %v660 = vld [vmem:[#allocation5 + $0xcc] sm:$0xf]
    %v661 = vld [vmem:[#allocation5 + $0xd0] sm:$0xf]
    %v662 = vld [vmem:[#allocation5 + $0xd4] sm:$0xf]
    %v663 = vld [vmem:[#allocation5 + $0xd8] sm:$0xf]
    %v664 = vld [vmem:[#allocation5 + $0xdc] sm:$0xf]
    %v665 = vld [vmem:[#allocation5 + $0xe0] sm:$0xf]
    %v666 = vld [vmem:[#allocation5 + $0xe4] sm:$0xf]
    %v667 = vld [vmem:[#allocation5 + $0xe8] sm:$0xf]
    %v668 = vld [vmem:[#allocation5 + $0xec] sm:$0xf]
    %v669 = vld [vmem:[#allocation5 + $0xf0] sm:$0xf]
    %v670 = vld [vmem:[#allocation5 + $0xf4] sm:$0xf]
    %v671 = vld [vmem:[#allocation5 + $0xf8] sm:$0xf]
    %v672 = vld [vmem:[#allocation5 + $0xfc] sm:$0xf]
    %v673 = vpack.c.bf16 %v652, %v652
    %v690 = vunpack.c.l.b16 %v657
    %v691 = vunpack.c.l.b16 %v658
    %v692 = vunpack.c.l.b16 %v659
    %v693 = vunpack.c.l.b16 %v660
    %v694 = vunpack.c.l.b16 %v661
    %v695 = vunpack.c.l.b16 %v662
    %v696 = vunpack.c.l.b16 %v663
    %v697 = vunpack.c.l.b16 %v664
    %v698 = vunpack.c.l.b16 %v665
    %v699 = vunpack.c.l.b16 %v666
    %v700 = vunpack.c.l.b16 %v667
    %v701 = vunpack.c.l.b16 %v668
    %v702 = vunpack.c.l.b16 %v669
    %v703 = vunpack.c.l.b16 %v670
    %v704 = vunpack.c.l.b16 %v671
    %v705 = vunpack.c.l.b16 %v672
    %v706 = vpack.c.b16 %v691, %v690
    %v707 = vpack.c.b16 %v693, %v692
    %v708 = vpack.c.b16 %v695, %v694
    %v709 = vpack.c.b16 %v697, %v696
    %v710 = vpack.c.b16 %v699, %v698
    %v711 = vpack.c.b16 %v701, %v700
    %v712 = vpack.c.b16 %v703, %v702
    %v713 = vpack.c.b16 %v705, %v704
    %722 = vmatprep.subr.bf16.mxu0 0
    %723 = vmatpush1.bf16.msra.mxu0 %v706
    %724 = vmatprep.subr.bf16.mxu0 0
    %725 = vmatpush1.bf16.msra.mxu0 %v707
    %726 = vmatprep.subr.bf16.mxu0 0
    %727 = vmatpush1.bf16.msra.mxu0 %v708
    %728 = vmatprep.subr.bf16.mxu0 0
    %729 = vmatpush1.bf16.msra.mxu0 %v709
    %730 = vmatprep.subr.bf16.mxu0 0
    %731 = vmatpush1.bf16.msra.mxu0 %v710
    %732 = vmatprep.subr.bf16.mxu0 0
    %733 = vmatpush1.bf16.msra.mxu0 %v711
    %734 = vmatprep.subr.bf16.mxu0 0
    %735 = vmatpush1.bf16.msra.mxu0 %v712
    %736 = vmatprep.subr.bf16.mxu0 0
    %737 = vmatpush1.bf16.msra.mxu0 %v713
    %738 = vmatprep.subr.bf16.mxu0 0
    %739 = vmatpush1.bf16.msra.mxu0 0
    %740 = vmatprep.subr.bf16.mxu0 0
    %741 = vmatpush1.bf16.msra.mxu0 0
    %742 = vmatprep.subr.bf16.mxu0 0
    %743 = vmatpush1.bf16.msra.mxu0 0
    %744 = vmatprep.subr.bf16.mxu0 0
    %745 = vmatpush1.bf16.msra.mxu0 0
    %746 = vmatprep.subr.bf16.mxu0 0
    %747 = vmatpush1.bf16.msra.mxu0 0
    %748 = vmatprep.subr.bf16.mxu0 0
    %749 = vmatpush1.bf16.msra.mxu0 0
    %750 = vmatprep.subr.bf16.mxu0 0
    %751 = vmatpush1.bf16.msra.mxu0 0
    %752 = vmatprep.subr.bf16.mxu0 0
    %753 = vmatpush1.bf16.msra.mxu0 0
    %754 = vmatprep.mubr.bf16.mxu0 0
    %755 = vmatmul.mubr.bf16.gmra.mrb[0].mxu0 %v673
    %v756 = vpop.f32.mrb[0].mxu0
    %v757 = vadd.f32 0.0, %v756
    %v758 = vpop.f32.mrb[0].mxu0
    %v759 = vpop.f32.mrb[0].mxu0
    %v760 = vpop.f32.mrb[0].mxu0
    %761 = vdwg.mxu0
    %v762 = vadd.f32 %v609, %v757
    %v763 = vld [vmem:[%s3] sm:$0x1]
    %v765 = vlaneseq
    %v766 = vshrl.u32 %v765, 7
    %v767 = vsub.s32 0, %v766
    %v768 = vrot.slane %v763, %v767
    %v770 = vadd.f32 %v762, %v768
    %v771 = vmax.f32 %v770, 0.0
    %v772 = vld [vmem:[#allocation7] sm:$0xf]
    %v773 = vld [vmem:[#allocation7 + $0x4] sm:$0xf]
    %v774 = vld [vmem:[#allocation7 + $0x8] sm:$0xf]
    %v775 = vld [vmem:[#allocation7 + $0xc] sm:$0xf]
    %v776 = vld [vmem:[#allocation7 + $0x10] sm:$0xf]
    %v777 = vld [vmem:[#allocation7 + $0x14] sm:$0xf]
    %v778 = vld [vmem:[#allocation7 + $0x18] sm:$0xf]
    %v779 = vld [vmem:[#allocation7 + $0x1c] sm:$0xf]
    %v780 = vld [vmem:[#allocation7 + $0x20] sm:$0xf]
    %v781 = vld [vmem:[#allocation7 + $0x24] sm:$0xf]
    %v782 = vld [vmem:[#allocation7 + $0x28] sm:$0xf]
    %v783 = vld [vmem:[#allocation7 + $0x2c] sm:$0xf]
    %v784 = vld [vmem:[#allocation7 + $0x30] sm:$0xf]
    %v785 = vld [vmem:[#allocation7 + $0x34] sm:$0xf]
    %v786 = vld [vmem:[#allocation7 + $0x38] sm:$0xf]
    %v787 = vld [vmem:[#allocation7 + $0x3c] sm:$0xf]
    %v788 = vld [vmem:[%s5] sm:$0x1]
    %v789 = vpack.c.bf16 %v771, %v771
    %v791 = vlaneseq
    %v792 = vshrl.u32 %v791, 7
    %v793 = vsub.s32 0, %v792
    %v794 = vrot.slane %v788, %v793
    %v812 = vunpack.c.l.b16 %v772
    %v813 = vunpack.c.l.b16 %v773
    %v814 = vunpack.c.l.b16 %v774
    %v815 = vunpack.c.l.b16 %v775
    %v816 = vunpack.c.l.b16 %v776
    %v817 = vunpack.c.l.b16 %v777
    %v818 = vunpack.c.l.b16 %v778
    %v819 = vunpack.c.l.b16 %v779
    %v820 = vunpack.c.l.b16 %v780
    %v821 = vunpack.c.l.b16 %v781
    %v822 = vunpack.c.l.b16 %v782
    %v823 = vunpack.c.l.b16 %v783
    %v824 = vunpack.c.l.b16 %v784
    %v825 = vunpack.c.l.b16 %v785
    %v826 = vunpack.c.l.b16 %v786
    %v827 = vunpack.c.l.b16 %v787
    %v828 = vpack.c.b16 %v813, %v812
    %v829 = vpack.c.b16 %v815, %v814
    %v830 = vpack.c.b16 %v817, %v816
    %v831 = vpack.c.b16 %v819, %v818
    %v832 = vpack.c.b16 %v821, %v820
    %v833 = vpack.c.b16 %v823, %v822
    %v834 = vpack.c.b16 %v825, %v824
    %v835 = vpack.c.b16 %v827, %v826
    %844 = vmatprep.subr.bf16.mxu0 0
    %845 = vmatpush1.bf16.msra.mxu0 %v828
    %846 = vmatprep.subr.bf16.mxu0 0
    %847 = vmatpush1.bf16.msra.mxu0 %v829
    %848 = vmatprep.subr.bf16.mxu0 0
    %849 = vmatpush1.bf16.msra.mxu0 %v830
    %850 = vmatprep.subr.bf16.mxu0 0
    %851 = vmatpush1.bf16.msra.mxu0 %v831
    %852 = vmatprep.subr.bf16.mxu0 0
    %853 = vmatpush1.bf16.msra.mxu0 %v832
    %854 = vmatprep.subr.bf16.mxu0 0
    %855 = vmatpush1.bf16.msra.mxu0 %v833
    %856 = vmatprep.subr.bf16.mxu0 0
    %857 = vmatpush1.bf16.msra.mxu0 %v834
    %858 = vmatprep.subr.bf16.mxu0 0
    %859 = vmatpush1.bf16.msra.mxu0 %v835
    %860 = vmatprep.subr.bf16.mxu0 0
    %861 = vmatpush1.bf16.msra.mxu0 0
    %862 = vmatprep.subr.bf16.mxu0 0
    %863 = vmatpush1.bf16.msra.mxu0 0
    %864 = vmatprep.subr.bf16.mxu0 0
    %865 = vmatpush1.bf16.msra.mxu0 0
    %866 = vmatprep.subr.bf16.mxu0 0
    %867 = vmatpush1.bf16.msra.mxu0 0
    %868 = vmatprep.subr.bf16.mxu0 0
    %869 = vmatpush1.bf16.msra.mxu0 0
    %870 = vmatprep.subr.bf16.mxu0 0
    %871 = vmatpush1.bf16.msra.mxu0 0
    %872 = vmatprep.subr.bf16.mxu0 0
    %873 = vmatpush1.bf16.msra.mxu0 0
    %874 = vmatprep.subr.bf16.mxu0 0
    %875 = vmatpush1.bf16.msra.mxu0 0
    %876 = vmatprep.mubr.bf16.mxu0 0
    %877 = vmatmul.mubr.bf16.gmra.mrb[0].mxu0 %v789
    %v878 = vpop.f32.mrb[0].mxu0
    %v879 = vadd.f32 %v794, %v878
    %v880 = vpop.f32.mrb[0].mxu0
    %v881 = vpop.f32.mrb[0].mxu0
    %v882 = vpop.f32.mrb[0].mxu0
    %883 = vdwg.mxu0
    %v884 = vmax.f32 %v879, 0.0
    %v885 = vld [vmem:[#allocation8] sm:$0xf]
    %v886 = vld [vmem:[#allocation8 + $0x4] sm:$0xf]
    %v887 = vld [vmem:[#allocation8 + $0x8] sm:$0xf]
    %v888 = vld [vmem:[#allocation8 + $0xc] sm:$0xf]
    %v889 = vld [vmem:[#allocation8 + $0x10] sm:$0xf]
    %v890 = vld [vmem:[#allocation8 + $0x14] sm:$0xf]
    %v891 = vld [vmem:[#allocation8 + $0x18] sm:$0xf]
    %v892 = vld [vmem:[#allocation8 + $0x1c] sm:$0xf]
    %v893 = vld [vmem:[#allocation8 + $0x20] sm:$0xf]
    %v894 = vld [vmem:[#allocation8 + $0x24] sm:$0xf]
    %v895 = vld [vmem:[#allocation8 + $0x28] sm:$0xf]
    %v896 = vld [vmem:[#allocation8 + $0x2c] sm:$0xf]
    %v897 = vld [vmem:[#allocation8 + $0x30] sm:$0xf]
    %v898 = vld [vmem:[#allocation8 + $0x34] sm:$0xf]
    %v899 = vld [vmem:[#allocation8 + $0x38] sm:$0xf]
    %v900 = vld [vmem:[#allocation8 + $0x3c] sm:$0xf]
    %v901 = vld [vmem:[%s7] sm:$0x1]
    %v902 = vpack.c.bf16 %v884, %v884
    %v904 = vlaneseq
    %v905 = vshrl.u32 %v904, 7
    %v906 = vsub.s32 0, %v905
    %v907 = vrot.slane %v901, %v906
    %v925 = vunpack.c.l.b16 %v885
    %v926 = vunpack.c.l.b16 %v886
    %v927 = vunpack.c.l.b16 %v887
    %v928 = vunpack.c.l.b16 %v888
    %v929 = vunpack.c.l.b16 %v889
    %v930 = vunpack.c.l.b16 %v890
    %v931 = vunpack.c.l.b16 %v891
    %v932 = vunpack.c.l.b16 %v892
    %v933 = vunpack.c.l.b16 %v893
    %v934 = vunpack.c.l.b16 %v894
    %v935 = vunpack.c.l.b16 %v895
    %v936 = vunpack.c.l.b16 %v896
    %v937 = vunpack.c.l.b16 %v897
    %v938 = vunpack.c.l.b16 %v898
    %v939 = vunpack.c.l.b16 %v899
    %v940 = vunpack.c.l.b16 %v900
    %v941 = vpack.c.b16 %v926, %v925
    %v942 = vpack.c.b16 %v928, %v927
    %v943 = vpack.c.b16 %v930, %v929
    %v944 = vpack.c.b16 %v932, %v931
    %v945 = vpack.c.b16 %v934, %v933
    %v946 = vpack.c.b16 %v936, %v935
    %v947 = vpack.c.b16 %v938, %v937
    %v948 = vpack.c.b16 %v940, %v939
    %957 = vmatprep.subr.bf16.mxu0 0
    %958 = vmatpush1.bf16.msra.mxu0 %v941
    %959 = vmatprep.subr.bf16.mxu0 0
    %960 = vmatpush1.bf16.msra.mxu0 %v942
    %961 = vmatprep.subr.bf16.mxu0 0
    %962 = vmatpush1.bf16.msra.mxu0 %v943
    %963 = vmatprep.subr.bf16.mxu0 0
    %964 = vmatpush1.bf16.msra.mxu0 %v944
    %965 = vmatprep.subr.bf16.mxu0 0
    %966 = vmatpush1.bf16.msra.mxu0 %v945
    %967 = vmatprep.subr.bf16.mxu0 0
    %968 = vmatpush1.bf16.msra.mxu0 %v946
    %969 = vmatprep.subr.bf16.mxu0 0
    %970 = vmatpush1.bf16.msra.mxu0 %v947
    %971 = vmatprep.subr.bf16.mxu0 0
    %972 = vmatpush1.bf16.msra.mxu0 %v948
    %973 = vmatprep.subr.bf16.mxu0 0
    %974 = vmatpush1.bf16.msra.mxu0 0
    %975 = vmatprep.subr.bf16.mxu0 0
    %976 = vmatpush1.bf16.msra.mxu0 0
    %977 = vmatprep.subr.bf16.mxu0 0
    %978 = vmatpush1.bf16.msra.mxu0 0
    %979 = vmatprep.subr.bf16.mxu0 0
    %980 = vmatpush1.bf16.msra.mxu0 0
    %981 = vmatprep.subr.bf16.mxu0 0
    %982 = vmatpush1.bf16.msra.mxu0 0
    %983 = vmatprep.subr.bf16.mxu0 0
    %984 = vmatpush1.bf16.msra.mxu0 0
    %985 = vmatprep.subr.bf16.mxu0 0
    %986 = vmatpush1.bf16.msra.mxu0 0
    %987 = vmatprep.subr.bf16.mxu0 0
    %988 = vmatpush1.bf16.msra.mxu0 0
    %989 = vmatprep.mubr.bf16.mxu0 0
    %990 = vmatmul.mubr.bf16.gmra.mrb[0].mxu0 %v902
    %v991 = vpop.f32.mrb[0].mxu0
    %v992 = vadd.f32 %v907, %v991
    %v993 = vpop.f32.mrb[0].mxu0
    %v994 = vpop.f32.mrb[0].mxu0
    %v995 = vpop.f32.mrb[0].mxu0
    %996 = vdwg.mxu0
    %997 = vst [vmem:[#allocation10] sm:$0xff] %v992
    // Predicated region
    $region50: #{mlp_fused_pallas.1} parent=1 // pred_check
      _
    $region51: #{mlp_fused_pallas.1} parent=1 // pred_check_branch
      %999 = sbr.rel (0) target = $region53
    $region52: #{mlp_fused_pallas.1} parent=1 // pred_region
      %s1001 = ssub.s32 128, 128
      %1002 = vsyncadd [#allocation4], %s1001
      %s1004 = sshll.u32 [#allocation10], 4
      %s1005 = int_to_ptr.vmem [resolvable:$true] %s1004
      %1007 = dma.vmem_to_hbm [thread:$0]  %s1005, 128, %s8, [#allocation4]
    $region53: #{mlp_fused_pallas.1} parent=1 // pred_fallthru
      _
    // Predicated region
    $region54: #{mlp_fused_pallas.1} parent=1 // pred_check
      _
    $region55: #{mlp_fused_pallas.1} parent=1 // pred_check_branch
      %1009 = sbr.rel (0) target = $region57
    $region56: #{mlp_fused_pallas.1} parent=1 // pred_region
      %1010 = dma.done [#allocation4], 128
    $region57: #{mlp_fused_pallas.1} parent=1 // pred_fallthru
      _
    %1011 = vsyncpa [#allocation3], 1
    %1012 = vsyncpa [#allocation6], 1
    %1013 = vsyncpa [#allocation9], 1
    %1014 = vsyncpa [#allocation4], 1

</llo_original>
